<compile_context>
chip_gen: v7x
topology: tpu7x:2x2x1
jax: 0.10.0
libtpu: 0.0.40
codegen_flags: <defaults>
</compile_context>

<pallas_src>
import functools

import numpy as np
import jax
import jax.numpy as jnp
from jax.experimental import pallas as pl
from jax.experimental.pallas import tpu as pltpu

LANE = 128


def _round_up(x, m):
    return (x + m - 1) // m * m


# ----------------------------- host-side operator / weight prep -----------------------------

def build_dft_operators(n, modes, n_lanes, dtype):
    """Truncated ortho-normalized rfft/irfft as dense matrices, zero-padded to n_lanes.

    Returns:
      f4: (n_lanes, 4*modes) = [Fr | Fi | Fr | Fi]  so  x_pad @ f4 = [XR | XI | XR | XI]
          (rows >= n are exactly 0).  Column duplication done here so the MXU produces the
          packed layout directly (no in-kernel concat).
      g4: (4*modes, n_lanes) = [Gr ; Gr ; Gi ; Gi]  so  y_pad = PP @ g4 where PP packs the
          four partial sums [sum XR*Wr | -sum XI*Wi | sum XR*Wi | sum XI*Wr]
          (cols >= n are exactly 0).

    Matches torch.rfft/irfft(normalized=True, onesided=True) with mode truncation:
    c_k = 2 for paired bins, 1 for DC (and Nyquist); the inverse ignores Im of DC/Nyquist.
    """
    assert modes <= n // 2 + 1, "cannot retain more modes than rfft bins"
    k = np.arange(modes)
    nn = np.arange(n)
    theta = 2.0 * np.pi * np.outer(nn, k) / n              # (n, modes)
    inv_sqrt_n = 1.0 / np.sqrt(n)
    fr = np.cos(theta) * inv_sqrt_n                        # (n, modes)
    fi = -np.sin(theta) * inv_sqrt_n

    f4 = np.zeros((n_lanes, 4 * modes), np.float32)
    f4[:n, 0 * modes:1 * modes] = fr
    f4[:n, 1 * modes:2 * modes] = fi
    f4[:n, 2 * modes:3 * modes] = fr
    f4[:n, 3 * modes:4 * modes] = fi

    ck = np.full((modes, 1), 2.0)
    ck[0, 0] = 1.0                                         # DC has no conjugate partner
    has_nyquist = (n % 2 == 0) and (modes == n // 2 + 1)
    if has_nyquist:
        ck[-1, 0] = 1.0
    gr = ck * np.cos(theta.T) * inv_sqrt_n                 # (modes, n)
    gi = -ck * np.sin(theta.T) * inv_sqrt_n
    gi[0, :] = 0.0                                         # irfft ignores Im of the DC bin
    if has_nyquist:
        gi[-1, :] = 0.0

    g4 = np.zeros((4 * modes, n_lanes), np.float32)
    g4[0 * modes:1 * modes, :n] = gr
    g4[1 * modes:2 * modes, :n] = gr
    g4[2 * modes:3 * modes, :n] = gi
    g4[3 * modes:4 * modes, :n] = gi
    return jnp.asarray(f4, dtype), jnp.asarray(g4, dtype)


def pack_spectral_weights(w_r, w_i):
    """(C_in, C_out, M) real/imag -> (C_in, C_out, 4M) packed as [Wr | -Wi | Wi | Wr].

    Pairs with the xf layout [XR | XI | XR | XI] so the complex per-mode channel mix is a
    single broadcast-multiply + reduce over C_in.
    """
    return jnp.concatenate([w_r, -w_i, w_i, w_r], axis=-1).astype(jnp.float32)


# ----------------------------- Pallas kernel -----------------------------

def spectral_conv1d_kernel(x_ref, f_ref, w_ref, g_ref, o_ref, *, c_in, c_out, tb, cin_chunk):
    # x_ref: (tb*C_in, Nl)   f_ref: (Nl, 4M)   w_ref: (C_in, C_out, 4M)   g_ref: (4M, Nl)
    # o_ref: (tb*C_out, Nl)
    four_m = f_ref.shape[-1]
    # (1) truncated ortho-rfft of every row in this batch tile: ONE MXU matmul.
    #     F4 = [Fr|Fi|Fr|Fi] => xf rows come out already packed as [XR|XI|XR|XI].
    xf = jnp.dot(x_ref[...], f_ref[...], preferred_element_type=jnp.float32)   # (tb*C_in, 4M) f32
    w = w_ref[...]                        # (C_in, C_out, 4M) packed [Wr|-Wi|Wi|Wr], f32 (hoisted)
    g = g_ref[...]                        # (4M, Nl), hoisted out of the batch loop

    for b in range(tb):                   # static unroll; tb is small by construction
        xf_b = xf[b * c_in:(b + 1) * c_in, :]                       # (C_in, 4M)
        # (2) complex per-mode channel mix on the VPU, contracted over C_in in chunks of 8 so
        #     only a (chunk, C_out, 4M) product + a (C_out, 4M) accumulator are ever live
        #     (no (C_in, C_out, 4M) materialization -> no vreg-file spill).
        acc = jnp.zeros((c_out, four_m), jnp.float32)
        for i0 in range(0, c_in, cin_chunk):
            i1 = min(i0 + cin_chunk, c_in)
            acc = acc + jnp.sum(xf_b[i0:i1, None, :] * w[i0:i1], axis=0)
        # (3) truncated ortho-irfft: per-batch MXU matmul stored straight into the
        #     sublane-aligned output rows (no sublane concat of per-batch results).
        o_ref[pl.ds(b * c_out, c_out), :] = jnp.dot(
            acc.astype(g.dtype), g, preferred_element_type=jnp.float32
        ).astype(o_ref.dtype)


# ----------------------------- pallas_call wrapper -----------------------------

def _pick_batch_tile(b, c_in, c_out, n_lanes, in_bytes):
    """Batch tile: big enough to amortize per-step overhead, small enough for v7x VMEM and to
    leave >=2 grid steps so both v7x TensorCores get work."""
    per_b = 2 * c_in * n_lanes * in_bytes + 2 * c_out * n_lanes * 4   # double-buffered x + y
    budget = 40 << 20                                                 # under v7x 64 MiB VMEM/TC
    tb = max(1, min(b, budget // max(per_b, 1)))
    if b > 1:
        tb = min(tb, pl.cdiv(b, 2))      # at least 2 grid steps -> megacore split on v7x
    tb = min(tb, 8)                      # bound the static per-batch unroll in the kernel
    while b % tb:                        # uniform grid
        tb -= 1
    return tb


def spectral_conv1d(x, w_cat, *, use_bf16=False):
    """x: (B, C_in, N) float32;  w_cat: packed spectral weights (C_in, C_out, 4*modes)."""
    b, c_in, n = x.shape
    c_in_w, c_out, four_m = w_cat.shape
    assert c_in_w == c_in
    modes = four_m // 4
    n_lanes = _round_up(n, LANE)
    op_dtype = jnp.bfloat16 if use_bf16 else jnp.float32   # MXU operand dtype
    in_bytes = 2 if use_bf16 else 4

    f4, g4 = build_dft_operators(n, modes, n_lanes, op_dtype)   # trace-time constants
    w_cat = w_cat.astype(jnp.float32)                           # channel mix stays f32 (VPU)

    x2d = x.reshape(b * c_in, n)                          # fold batch into matmul rows
    if n_lanes != n:
        x2d = jnp.pad(x2d, ((0, 0), (0, n_lanes - n)))    # lane-align the spatial axis
    x2d = x2d.astype(op_dtype)

    tb = _pick_batch_tile(b, c_in, c_out, n_lanes, in_bytes)
    if c_in % 8 or c_out % 8:
        # Non-sublane-aligned channel counts: use one full-array block so block shapes equal
        # the array dims (the (8,128) divisibility rule then does not apply).
        tb = b
    grid = (b // tb,)

    # Explicit per-call VMEM budget: double-buffered x/y tiles + resident F4/W/G4 + xf/acc
    # temporaries, with headroom, clamped below v7x's 64 MiB per TensorCore.
    est = (2 * tb * c_in * n_lanes * in_bytes
           + 2 * tb * c_out * n_lanes * 4
           + 2 * n_lanes * four_m * in_bytes
           + 2 * c_in * c_out * four_m * 4
           + 2 * four_m * n_lanes * in_bytes
           + tb * c_in * four_m * 4
           + 4 * c_out * four_m * 4)
    vmem_limit = int(min(max(4 * est, 16 << 20), 48 << 20))

    kern = functools.partial(spectral_conv1d_kernel, c_in=c_in, c_out=c_out, tb=tb,
                             cin_chunk=min(8, c_in))
    y2d = pl.pallas_call(
        kern,
        out_shape=jax.ShapeDtypeStruct((b * c_out, n_lanes), jnp.float32),
        grid=grid,
        in_specs=[
            pl.BlockSpec((tb * c_in, n_lanes), lambda i: (i, 0)),       # batch tile of x
            pl.BlockSpec((n_lanes, four_m), lambda i: (0, 0)),          # F4 (stays resident)
            pl.BlockSpec((c_in, c_out, four_m), lambda i: (0, 0, 0)),   # packed W (resident)
            pl.BlockSpec((four_m, n_lanes), lambda i: (0, 0)),          # G4 (stays resident)
        ],
        out_specs=pl.BlockSpec((tb * c_out, n_lanes), lambda i: (i, 0)),
        compiler_params=pltpu.CompilerParams(
            dimension_semantics=("parallel",),          # independent batch tiles -> megacore
            vmem_limit_bytes=vmem_limit),
    )(x2d, f4, w_cat, g4)

    y = y2d.reshape(b, c_out, n_lanes)
    return y[..., :n]                                     # crop lane padding (no-op if N%128==0)


# ----------------------------- pure-JAX reference (for verification) -----------------------------

def spectral_conv1d_reference(x, w_r, w_i, modes):
    """Mirrors the PyTorch module: ortho rfft -> compl_mul1d on first `modes` bins -> ortho irfft."""
    n = x.shape[-1]
    c_out = w_r.shape[1]
    x_ft = jnp.fft.rfft(x, axis=-1, norm="ortho")
    w = (w_r + 1j * w_i).astype(jnp.complex64)
    out_m = jnp.einsum('bix,iox->box', x_ft[..., :modes].astype(jnp.complex64), w)
    # torch.irfft ignores the imaginary part of the DC (and Nyquist) bin; make it explicit.
    drop_imag = jnp.arange(modes) == 0
    if n % 2 == 0 and modes == n // 2 + 1:
        drop_imag = drop_imag | (jnp.arange(modes) == modes - 1)
    out_m = jnp.where(drop_imag, out_m.real.astype(jnp.complex64), out_m)
    out_ft = jnp.zeros((x.shape[0], c_out, n // 2 + 1), jnp.complex64)
    out_ft = out_ft.at[..., :modes].set(out_m)
    return jnp.fft.irfft(out_ft, n=n, axis=-1, norm="ortho")


if __name__ == "__main__":
    B, C_IN, C_OUT, MODES, N = 2, 32, 32, 16, 128
    key = jax.random.PRNGKey(0)
    wkey, xkey = jax.random.split(key)

    scale = 1.0 / (C_IN * C_OUT)
    w = scale * jax.random.uniform(wkey, (C_IN, C_OUT, MODES, 2), dtype=jnp.float32)
    w_r, w_i = w[..., 0], w[..., 1]
    x = jax.random.normal(xkey, (B, C_IN, N), dtype=jnp.float32)

    # One-time host/graph-side weight re-layout (kept out of the kernel).
    w_cat = pack_spectral_weights(w_r, w_i)
    ref = spectral_conv1d_reference(x, w_r, w_i, MODES)

    # Exact f32 path.
    fwd = jax.jit(functools.partial(spectral_conv1d, use_bf16=False))
    out = fwd(x, w_cat)
    jax.block_until_ready(out)
    assert out.shape == (B, C_OUT, N) and out.dtype == jnp.float32
    np.testing.assert_allclose(np.asarray(out), np.asarray(ref), rtol=1e-2, atol=5e-5)

    # bf16-operand MXU path (v6e/v7x fast path), f32 accumulation: looser tolerance.
    fwd_bf16 = jax.jit(functools.partial(spectral_conv1d, use_bf16=True))
    out_bf = fwd_bf16(x, w_cat)
    jax.block_until_ready(out_bf)
    np.testing.assert_allclose(np.asarray(out_bf), np.asarray(ref), rtol=5e-2, atol=2e-4)

    print("KERNEL_OK")
</pallas_src>

<mosaic_0001>
module attributes {stable_mosaic.version = 11 : i64} {
  func.func @spectral_conv1d_kernel(%arg0: i32, %arg1: memref<32x128xf32, #tpu.memory_space<vmem>>, %arg2: memref<128x64xf32, #tpu.memory_space<vmem>>, %arg3: memref<32x32x64xf32, #tpu.memory_space<vmem>>, %arg4: memref<64x128xf32, #tpu.memory_space<vmem>>, %arg5: memref<32x128xf32, #tpu.memory_space<vmem>>) attributes {dimension_semantics = [#tpu.dimension_semantics<parallel>], iteration_bounds = array<i64: 2>, scalar_prefetch = 0 : i64, scratch_operands = 0 : i64, tpu.core_type = #tpu.core_type<tc>, window_params = [{transform_indices = @transform_0, window_bounds = array<i64: 32, 128>}, {pipeline_mode = #tpu.pipeline_mode<synchronous>, transform_indices = @transform_1, window_bounds = array<i64: 128, 64>}, {pipeline_mode = #tpu.pipeline_mode<synchronous>, transform_indices = @transform_2, window_bounds = array<i64: 32, 32, 64>}, {pipeline_mode = #tpu.pipeline_mode<synchronous>, transform_indices = @transform_3, window_bounds = array<i64: 64, 128>}, {transform_indices = @transform_4, window_bounds = array<i64: 32, 128>}]} {
    %c0 = arith.constant 0 : index
    %c0_0 = arith.constant 0 : index
    %0 = vector.load %arg1[%c0, %c0_0] : memref<32x128xf32, #tpu.memory_space<vmem>>, vector<32x128xf32>
    %c0_1 = arith.constant 0 : index
    %c0_2 = arith.constant 0 : index
    %1 = vector.load %arg2[%c0_1, %c0_2] : memref<128x64xf32, #tpu.memory_space<vmem>>, vector<128x64xf32>
    %cst = arith.constant dense<0.000000e+00> : vector<32x64xf32>
    %2 = tpu.matmul %0, %1, %cst {dimension_numbers = #tpu.dot_dimension_numbers<[1], [0], [0], [1], [0, 0, 1, 1], [], []>} : vector<32x128xf32>, vector<128x64xf32>, vector<32x64xf32> -> vector<32x64xf32>
    %c0_3 = arith.constant 0 : index
    %c0_4 = arith.constant 0 : index
    %c0_5 = arith.constant 0 : index
    %3 = vector.load %arg3[%c0_3, %c0_4, %c0_5] : memref<32x32x64xf32, #tpu.memory_space<vmem>>, vector<32x32x64xf32>
    %c0_6 = arith.constant 0 : index
    %c0_7 = arith.constant 0 : index
    %4 = vector.load %arg4[%c0_6, %c0_7] : memref<64x128xf32, #tpu.memory_space<vmem>>, vector<64x128xf32>
    %cst_8 = arith.constant 0.000000e+00 : f32
    %5 = vector.broadcast %cst_8 : f32 to vector<32x64xf32>
    %6 = vector.extract_strided_slice %2 {offsets = [0, 0], sizes = [8, 64], strides = [1, 1]} : vector<32x64xf32> to vector<8x64xf32>
    %7 = vector.shape_cast %6 : vector<8x64xf32> to vector<8x1x64xf32>
    %8 = vector.extract_strided_slice %3 {offsets = [0, 0, 0], sizes = [8, 32, 64], strides = [1, 1, 1]} : vector<32x32x64xf32> to vector<8x32x64xf32>
    %9 = vector.broadcast %7 : vector<8x1x64xf32> to vector<8x32x64xf32>
    %10 = arith.mulf %9, %8 : vector<8x32x64xf32>
    %cst_9 = arith.constant dense<0.000000e+00> : vector<32x64xf32>
    %11 = vector.multi_reduction <add>, %10, %cst_9 [0] : vector<8x32x64xf32> to vector<32x64xf32>
    %12 = arith.addf %5, %11 : vector<32x64xf32>
    %13 = vector.extract_strided_slice %2 {offsets = [8, 0], sizes = [8, 64], strides = [1, 1]} : vector<32x64xf32> to vector<8x64xf32>
    %14 = vector.shape_cast %13 : vector<8x64xf32> to vector<8x1x64xf32>
    %15 = vector.extract_strided_slice %3 {offsets = [8, 0, 0], sizes = [8, 32, 64], strides = [1, 1, 1]} : vector<32x32x64xf32> to vector<8x32x64xf32>
    %16 = vector.broadcast %14 : vector<8x1x64xf32> to vector<8x32x64xf32>
    %17 = arith.mulf %16, %15 : vector<8x32x64xf32>
    %cst_10 = arith.constant dense<0.000000e+00> : vector<32x64xf32>
    %18 = vector.multi_reduction <add>, %17, %cst_10 [0] : vector<8x32x64xf32> to vector<32x64xf32>
    %19 = arith.addf %12, %18 : vector<32x64xf32>
    %20 = vector.extract_strided_slice %2 {offsets = [16, 0], sizes = [8, 64], strides = [1, 1]} : vector<32x64xf32> to vector<8x64xf32>
    %21 = vector.shape_cast %20 : vector<8x64xf32> to vector<8x1x64xf32>
    %22 = vector.extract_strided_slice %3 {offsets = [16, 0, 0], sizes = [8, 32, 64], strides = [1, 1, 1]} : vector<32x32x64xf32> to vector<8x32x64xf32>
    %23 = vector.broadcast %21 : vector<8x1x64xf32> to vector<8x32x64xf32>
    %24 = arith.mulf %23, %22 : vector<8x32x64xf32>
    %cst_11 = arith.constant dense<0.000000e+00> : vector<32x64xf32>
    %25 = vector.multi_reduction <add>, %24, %cst_11 [0] : vector<8x32x64xf32> to vector<32x64xf32>
    %26 = arith.addf %19, %25 : vector<32x64xf32>
    %27 = vector.extract_strided_slice %2 {offsets = [24, 0], sizes = [8, 64], strides = [1, 1]} : vector<32x64xf32> to vector<8x64xf32>
    %28 = vector.shape_cast %27 : vector<8x64xf32> to vector<8x1x64xf32>
    %29 = vector.extract_strided_slice %3 {offsets = [24, 0, 0], sizes = [8, 32, 64], strides = [1, 1, 1]} : vector<32x32x64xf32> to vector<8x32x64xf32>
    %30 = vector.broadcast %28 : vector<8x1x64xf32> to vector<8x32x64xf32>
    %31 = arith.mulf %30, %29 : vector<8x32x64xf32>
    %cst_12 = arith.constant dense<0.000000e+00> : vector<32x64xf32>
    %32 = vector.multi_reduction <add>, %31, %cst_12 [0] : vector<8x32x64xf32> to vector<32x64xf32>
    %33 = arith.addf %26, %32 : vector<32x64xf32>
    %cst_13 = arith.constant dense<0.000000e+00> : vector<32x128xf32>
    %34 = tpu.matmul %33, %4, %cst_13 {dimension_numbers = #tpu.dot_dimension_numbers<[1], [0], [0], [1], [0, 0, 1, 1], [], []>} : vector<32x64xf32>, vector<64x128xf32>, vector<32x128xf32> -> vector<32x128xf32>
    %c0_14 = arith.constant 0 : index
    %c0_15 = arith.constant 0 : index
    %35 = vector.load %arg5[%c0_14, %c0_15] : memref<32x128xf32, #tpu.memory_space<vmem>>, vector<32x128xf32>
    tpu.vector_store %arg5[%c0_14, %c0_15], %34 {strides = array<i32>} : memref<32x128xf32, #tpu.memory_space<vmem>>, vector<32x128xf32>,
    return
  }
  func.func @transform_0(%arg0: i32) -> (i32, i32) {
    %c0_i32 = arith.constant 0 : i32
    %c0_i32_0 = arith.constant 0 : i32
    return %arg0, %c0_i32 : i32, i32
  }
  func.func @transform_1(%arg0: i32) -> (i32, i32) {
    %c0_i32 = arith.constant 0 : i32
    %c0_i32_0 = arith.constant 0 : i32
    %c0_i32_1 = arith.constant 0 : i32
    return %c0_i32, %c0_i32_0 : i32, i32
  }
  func.func @transform_2(%arg0: i32) -> (i32, i32, i32) {
    %c0_i32 = arith.constant 0 : i32
    %c0_i32_0 = arith.constant 0 : i32
    %c0_i32_1 = arith.constant 0 : i32
    %c0_i32_2 = arith.constant 0 : i32
    return %c0_i32, %c0_i32_0, %c0_i32_1 : i32, i32, i32
  }
  func.func @transform_3(%arg0: i32) -> (i32, i32) {
    %c0_i32 = arith.constant 0 : i32
    %c0_i32_0 = arith.constant 0 : i32
    %c0_i32_1 = arith.constant 0 : i32
    return %c0_i32, %c0_i32_0 : i32, i32
  }
  func.func @transform_4(%arg0: i32) -> (i32, i32) {
    %c0_i32 = arith.constant 0 : i32
    %c0_i32_0 = arith.constant 0 : i32
    return %arg0, %c0_i32 : i32, i32
  }
}

</mosaic_0001>

<llo_original>
// kernel: spectral_conv1d.1
$region0: #{spectral_conv1d.1}
  #allocation0 [shape = 'u32[]', space=smem, size = 0x4, offset = 0x4, fixed_abs, tag = 'smem constant byte address 0x4 - core index']
  #allocation1 [shape = 'u32[144,128]{1,0:T(1,128)}', space=vmem, size = 0x12000, scoped, tag = 'internal scratch']
  %s0 = inlined_call_operand.hbm [shape: f32[64,128], index: 0, kind: input, shape index: {}]
  %s1 = inlined_call_operand.hbm [shape: f32[128,64], index: 1, kind: input, shape index: {}]
  %s2 = inlined_call_operand.hbm [shape: f32[32,32,64], index: 2, kind: input, shape index: {}]
  %s3 = inlined_call_operand.hbm [shape: f32[64,128], index: 3, kind: input, shape index: {}]
  %s4 = inlined_call_operand.hbm [shape: f32[64,128], index: 4, kind: output, shape index: {}]
  %s5 = sld [smem:[#allocation0]]
  $region65: #{spectral_conv1d.1} parent=0
    _
  %s7 = ssub.s32 1, %s5
  %s8 = scalar_select 0, %s7, %s5
  $region1: #{spectral_conv1d.1} parent=0
    #allocation2 [shape = 'u8[32768]{0}', space=vmem, size = 0x8000, scoped, tag = 'input window, operand 0']
    #allocation3 [shape = 's32[2]{0}', space=sflag, size = 0x8, scoped, tag = 'scoped memory for spectral_conv1d.1']
    #allocation4 [shape = 's32[2]{0}', space=sflag, size = 0x8, scoped, tag = 'scoped memory for spectral_conv1d.1']
    #allocation5 [shape = 'u8[65536]{0}', space=vmem, size = 0x10000, scoped, tag = 'input window, operand 1, single buffered']
    #allocation6 [shape = 's32[1]{0}', space=sflag, size = 0x4, scoped, tag = 'scoped memory for spectral_conv1d.1']
    #allocation7 [shape = 'u8[524288]{0}', space=vmem, size = 0x80000, scoped, tag = 'input window, operand 2, single buffered']
    #allocation8 [shape = 'u8[32768]{0}', space=vmem, size = 0x8000, scoped, tag = 'input window, operand 3, single buffered']
    #allocation9 [shape = 's32[1]{0}', space=sflag, size = 0x4, scoped, tag = 'scoped memory for spectral_conv1d.1']
    #allocation10 [shape = 'u8[32768]{0}', space=vmem, size = 0x8000, scoped, tag = 'output window, operand 0']
    %9 = vsyncpa [#allocation3], 0
    %s10 = scalar_lea.sflag [#allocation3], 1
    %11 = vsyncpa %s10, 0
    %12 = vsyncpa [#allocation6], 0
    %13 = vsyncpa [#allocation9], 0
    %14 = vsyncpa [#allocation4], 0
    %s15 = scalar_lea.sflag [#allocation4], 1
    %16 = vsyncpa %s15, 0
    loop: start=0, step=1, limit=4
    $region2: #{spectral_conv1d.1} parent=1 // loop_pre_header
      _
    $region3: #{spectral_conv1d.1} parent=1 // loop_header
      %s18 = sphi 0, %s22
      %p19 = scmp.ge.s32.totalorder %s18, 4
      %s28 = sphi 0, %s30
      %s31 = sphi 0, %s28
      %s32 = sphi 0, %s31
      %s48 = sphi 0, %s32
      %s52 = sphi 0, %s52
      %s54 = sphi 0, %s52
      %s55 = sphi 0, %s54
      %s69 = sphi 0, %s55
      %s73 = sphi 0, %s73
      %s75 = sphi 0, %s73
      %s76 = sphi 0, %s75
      %s90 = sphi 0, %s76
      %s94 = sphi 0, %s94
      %s96 = sphi 0, %s94
      %s97 = sphi 0, %s96
      %s111 = sphi 0, %s97
      %s117 = sphi 0, %s119
      %s120 = sphi 0, %s117
      %s121 = sphi 0, %s120
      %s137 = sphi 0, %s121
    $region4: #{spectral_conv1d.1} parent=1 // loop_header_branch
      %21 = sbr.rel (%p19) target = $region8
    $region5: #{spectral_conv1d.1} parent=1 // loop_body
      %s23 = ssub.s32 %s18, 1
      %s24 = ssub.s32 %s18, 2
      %s25 = sadd.s32 %s18, 1
      %s26 = ssub.s32 %s18, %s25
      %p27 = scmp.eq.s32.totalorder %s26, 0
      %s29 = sadd.s32 %s28, 1
      %s30 = scalar_select %p27, %s28, %s29
      %p33 = pneg %p27
      %p34 = scmp.eq.s32.totalorder %s18, 1
      %p35 = por %p33, %p34
      %p36 = scmp.ne.s32.totalorder %s28, %s31
      %p37 = scmp.eq.s32.totalorder %s18, 0
      %p38 = por %p36, %p37
      %p39 = scmp.ne.s32.totalorder %s28, %s31
      %p40 = scmp.eq.s32.totalorder %s23, 1
      %p41 = por %p39, %p40
      %p42 = scmp.ne.s32.totalorder %s31, %s32
      %p43 = scmp.eq.s32.totalorder %s23, 0
      %p44 = por %p42, %p43
      %p45 = scmp.ne.s32.totalorder %s31, %s32
      %p46 = scmp.eq.s32.totalorder %s24, 1
      %p47 = por %p45, %p46
      %p49 = scmp.ne.s32.totalorder %s32, %s48
      %p50 = scmp.eq.s32.totalorder %s24, 0
      %p51 = por %p49, %p50
      %s53 = sadd.s32 %s52, 1
      %p56 = scmp.eq.s32.totalorder %s18, 1
      %p57 = scmp.ne.s32.totalorder %s52, %s54
      %p58 = scmp.eq.s32.totalorder %s18, 0
      %p59 = por %p57, %p58
      %p60 = scmp.ne.s32.totalorder %s52, %s54
      %p61 = scmp.eq.s32.totalorder %s23, 1
      %p62 = por %p60, %p61
      %p63 = scmp.ne.s32.totalorder %s54, %s55
      %p64 = scmp.eq.s32.totalorder %s23, 0
      %p65 = por %p63, %p64
      %p66 = scmp.ne.s32.totalorder %s54, %s55
      %p67 = scmp.eq.s32.totalorder %s24, 1
      %p68 = por %p66, %p67
      %p70 = scmp.ne.s32.totalorder %s55, %s69
      %p71 = scmp.eq.s32.totalorder %s24, 0
      %p72 = por %p70, %p71
      %s74 = sadd.s32 %s73, 1
      %p77 = scmp.eq.s32.totalorder %s18, 1
      %p78 = scmp.ne.s32.totalorder %s73, %s75
      %p79 = scmp.eq.s32.totalorder %s18, 0
      %p80 = por %p78, %p79
      %p81 = scmp.ne.s32.totalorder %s73, %s75
      %p82 = scmp.eq.s32.totalorder %s23, 1
      %p83 = por %p81, %p82
      %p84 = scmp.ne.s32.totalorder %s75, %s76
      %p85 = scmp.eq.s32.totalorder %s23, 0
      %p86 = por %p84, %p85
      %p87 = scmp.ne.s32.totalorder %s75, %s76
      %p88 = scmp.eq.s32.totalorder %s24, 1
      %p89 = por %p87, %p88
      %p91 = scmp.ne.s32.totalorder %s76, %s90
      %p92 = scmp.eq.s32.totalorder %s24, 0
      %p93 = por %p91, %p92
      %s95 = sadd.s32 %s94, 1
      %p98 = scmp.eq.s32.totalorder %s18, 1
      %p99 = scmp.ne.s32.totalorder %s94, %s96
      %p100 = scmp.eq.s32.totalorder %s18, 0
      %p101 = por %p99, %p100
      %p102 = scmp.ne.s32.totalorder %s94, %s96
      %p103 = scmp.eq.s32.totalorder %s23, 1
      %p104 = por %p102, %p103
      %p105 = scmp.ne.s32.totalorder %s96, %s97
      %p106 = scmp.eq.s32.totalorder %s23, 0
      %p107 = por %p105, %p106
      %p108 = scmp.ne.s32.totalorder %s96, %s97
      %p109 = scmp.eq.s32.totalorder %s24, 1
      %p110 = por %p108, %p109
      %p112 = scmp.ne.s32.totalorder %s97, %s111
      %p113 = scmp.eq.s32.totalorder %s24, 0
      %p114 = por %p112, %p113
      %s115 = ssub.s32 %s18, %s25
      %p116 = scmp.eq.s32.totalorder %s115, 0
      %s118 = sadd.s32 %s117, 1
      %s119 = scalar_select %p116, %s117, %s118
      %p122 = pneg %p116
      %p123 = scmp.eq.s32.totalorder %s18, 1
      %p124 = por %p122, %p123
      %p125 = scmp.ne.s32.totalorder %s117, %s120
      %p126 = scmp.eq.s32.totalorder %s18, 0
      %p127 = por %p125, %p126
      %p128 = scmp.ne.s32.totalorder %s117, %s120
      %p129 = scmp.eq.s32.totalorder %s23, 1
      %p130 = por %p128, %p129
      %p131 = scmp.ne.s32.totalorder %s120, %s121
      %p132 = scmp.eq.s32.totalorder %s23, 0
      %p133 = por %p131, %p132
      %p134 = scmp.ne.s32.totalorder %s120, %s121
      %p135 = scmp.eq.s32.totalorder %s24, 1
      %p136 = por %p134, %p135
      %p138 = scmp.ne.s32.totalorder %s121, %s137
      %p139 = scmp.eq.s32.totalorder %s24, 0
      %p140 = por %p138, %p139
      %p141 = scmp.le.s32.totalorder 1, %s18
      %p142 = scmp.lt.s32.totalorder %s18, 3
      %p143 = pnand %p141, %p142
      %p144 = pneg %p143
      // Predicated region
      $region9: #{spectral_conv1d.1} parent=5 // pred_check
        _
      $region10: #{spectral_conv1d.1} parent=5 // pred_check_branch
        %146 = sbr.rel (%p143) target = $region12
      $region11: #{spectral_conv1d.1} parent=5 // pred_region
        %s147 = ssub.s32 %s18, 1
        // Predicated region
        $region13: #{spectral_conv1d.1} parent=11 // pred_check
          %p148 = pneg %p65
        $region14: #{spectral_conv1d.1} parent=11 // pred_check_branch
          %150 = sbr.rel (%p148) target = $region16
        $region15: #{spectral_conv1d.1} parent=11 // pred_region
          %s152 = ssub.s32 2048, 2048
          %153 = vsyncadd [#allocation6], %s152
          %s154 = sshll.u32 [#allocation5], 4
          %s155 = int_to_ptr.vmem [resolvable:$true] %s154
          %160 = dma.hbm_to_vmem [thread:$0]  %s1, 2048, %s155, [#allocation6], 128, 128, 8
        $region16: #{spectral_conv1d.1} parent=11 // pred_fallthru
          _
        // Predicated region
        $region17: #{spectral_conv1d.1} parent=11 // pred_check
          %p161 = pneg %p86
        $region18: #{spectral_conv1d.1} parent=11 // pred_check_branch
          %163 = sbr.rel (%p161) target = $region20
        $region19: #{spectral_conv1d.1} parent=11 // pred_region
          %s165 = ssub.s32 16384, 16384
          %166 = vsyncadd [#allocation6], %s165
          %s167 = sshll.u32 [#allocation7], 4
          %s168 = int_to_ptr.vmem [resolvable:$true] %s167
          %173 = dma.hbm_to_vmem [thread:$0]  %s2, 16384, %s168, [#allocation6], 128, 128, 8
        $region20: #{spectral_conv1d.1} parent=11 // pred_fallthru
          _
        // Predicated region
        $region21: #{spectral_conv1d.1} parent=11 // pred_check
          %p174 = pneg %p107
        $region22: #{spectral_conv1d.1} parent=11 // pred_check_branch
          %176 = sbr.rel (%p174) target = $region24
        $region23: #{spectral_conv1d.1} parent=11 // pred_region
          %s178 = ssub.s32 1024, 1024
          %179 = vsyncadd [#allocation9], %s178
          %s180 = sshll.u32 [#allocation8], 4
          %s181 = int_to_ptr.vmem [resolvable:$true] %s180
          %186 = dma.hbm_to_vmem [thread:$0]  %s3, 1024, %s181, [#allocation9], 128, 128, 8
        $region24: #{spectral_conv1d.1} parent=11 // pred_fallthru
          _
      $region12: #{spectral_conv1d.1} parent=5 // pred_fallthru
        _
      %p187 = scmp.lt.s32.totalorder %s18, 2
      // Predicated region
      $region25: #{spectral_conv1d.1} parent=5 // pred_check
        %p188 = pneg %p187
      $region26: #{spectral_conv1d.1} parent=5 // pred_check_branch
        %190 = sbr.rel (%p188) target = $region28
      $region27: #{spectral_conv1d.1} parent=5 // pred_region
        // Predicated region
        $region29: #{spectral_conv1d.1} parent=27 // pred_check
          %p191 = pneg %p38
        $region30: #{spectral_conv1d.1} parent=27 // pred_check_branch
          %193 = sbr.rel (%p191) target = $region32
        $region31: #{spectral_conv1d.1} parent=27 // pred_region
          %s194 = sand.u32 %s28, 1
          %s195 = scalar_lea.sflag [#allocation3], %s194
          %s196 = sand.u32 %s28, 1
          %s197 = smul.addr %s196, 32
          %s198 = scalar_lea.vmem [#allocation2], %s197
          %s199 = smul.u32 4, %s18
          %s201 = ssub.s32 512, 512
          %202 = vsyncadd %s195, %s201
          %s203 = smul.addr %s199, 128
          %s204 = scalar_lea.hbm %s0, %s203
          %s205 = sshll.u32 %s198, 4
          %s206 = int_to_ptr.vmem [resolvable:$true] %s205
          %211 = dma.hbm_to_vmem [thread:$0]  %s204, 512, %s206, %s195, 128, 128, 8
        $region32: #{spectral_conv1d.1} parent=27 // pred_fallthru
          _
      $region28: #{spectral_conv1d.1} parent=5 // pred_fallthru
        _
      %p212 = scmp.le.s32.totalorder 1, %s18
      %p213 = scmp.lt.s32.totalorder %s18, 3
      %p214 = pnand %p212, %p213
      %p215 = pneg %p214
      // Predicated region
      $region33: #{spectral_conv1d.1} parent=5 // pred_check
        _
      $region34: #{spectral_conv1d.1} parent=5 // pred_check_branch
        %217 = sbr.rel (%p214) target = $region36
      $region35: #{spectral_conv1d.1} parent=5 // pred_region
        %s218 = ssub.s32 %s18, 1
        %s219 = sand.u32 %s31, 1
        %s220 = scalar_lea.sflag [#allocation3], %s219
        %s221 = sand.u32 %s31, 1
        %s222 = smul.addr %s221, 32
        %s223 = scalar_lea.vmem [#allocation2], %s222
        // Predicated region
        $region37: #{spectral_conv1d.1} parent=35 // pred_check
          %p224 = pneg %p44
        $region38: #{spectral_conv1d.1} parent=35 // pred_check_branch
          %226 = sbr.rel (%p224) target = $region40
        $region39: #{spectral_conv1d.1} parent=35 // pred_region
          %227 = dma.done %s220, 512
        $region40: #{spectral_conv1d.1} parent=35 // pred_fallthru
          _
        // Predicated region
        $region41: #{spectral_conv1d.1} parent=35 // pred_check
          %p228 = pneg %p65
        $region42: #{spectral_conv1d.1} parent=35 // pred_check_branch
          %230 = sbr.rel (%p228) target = $region44
        $region43: #{spectral_conv1d.1} parent=35 // pred_region
          %231 = dma.done [#allocation6], 2048
        $region44: #{spectral_conv1d.1} parent=35 // pred_fallthru
          _
        // Predicated region
        $region45: #{spectral_conv1d.1} parent=35 // pred_check
          %p232 = pneg %p86
        $region46: #{spectral_conv1d.1} parent=35 // pred_check_branch
          %234 = sbr.rel (%p232) target = $region48
        $region47: #{spectral_conv1d.1} parent=35 // pred_region
          %235 = dma.done [#allocation6], 16384
        $region48: #{spectral_conv1d.1} parent=35 // pred_fallthru
          _
        // Predicated region
        $region49: #{spectral_conv1d.1} parent=35 // pred_check
          %p236 = pneg %p107
        $region50: #{spectral_conv1d.1} parent=35 // pred_check_branch
          %238 = sbr.rel (%p236) target = $region52
        $region51: #{spectral_conv1d.1} parent=35 // pred_region
          %239 = dma.done [#allocation9], 1024
        $region52: #{spectral_conv1d.1} parent=35 // pred_fallthru
          _
        %s240 = sand.u32 %s31, 1
        %s241 = scalar_lea.sflag [#allocation3], %s240
        %s242 = sand.u32 %s31, 1
        %s243 = smul.addr %s242, 32
        %s244 = scalar_lea.vmem [#allocation2], %s243
        %p245 = pneg %p44
        %p246 = pneg %p41
        %p247 = pneg %p65
        %p248 = pneg %p62
        %p249 = pneg %p86
        %p250 = pneg %p83
        %p251 = pneg %p107
        %p252 = pneg %p104
        %p253 = pneg %p133
        %p254 = pneg %p130
        %s255 = sand.u32 %s120, 1
        %s256 = scalar_lea.sflag [#allocation4], %s255
        %s257 = sand.u32 %s120, 1
        %s258 = smul.addr %s257, 32
        %s259 = scalar_lea.vmem [#allocation10], %s258
        %s260 = smul.u32 4, %s23
        %s261 = smul.u32 4, %s23
        %v262 = vld [vmem:[%s223] sm:$0xff]
        %v263 = vld [vmem:[%s223 + $0x8] sm:$0xff]
        %v264 = vld [vmem:[%s223 + $0x10] sm:$0xff]
        %v265 = vld [vmem:[%s223 + $0x18] sm:$0xff]
        %v266 = vld [vmem:[#allocation5] sm:$0xff]
        %v267 = vld [vmem:[#allocation5 + $0x8] sm:$0xff]
        %v268 = vld [vmem:[#allocation5 + $0x10] sm:$0xff]
        %v269 = vld [vmem:[#allocation5 + $0x18] sm:$0xff]
        %v270 = vld [vmem:[#allocation5 + $0x20] sm:$0xff]
        %v271 = vld [vmem:[#allocation5 + $0x28] sm:$0xff]
        %v272 = vld [vmem:[#allocation5 + $0x30] sm:$0xff]
        %v273 = vld [vmem:[#allocation5 + $0x38] sm:$0xff]
        %v274 = vld [vmem:[#allocation5 + $0x40] sm:$0xff]
        %v275 = vld [vmem:[#allocation5 + $0x48] sm:$0xff]
        %v276 = vld [vmem:[#allocation5 + $0x50] sm:$0xff]
        %v277 = vld [vmem:[#allocation5 + $0x58] sm:$0xff]
        %v278 = vld [vmem:[#allocation5 + $0x60] sm:$0xff]
        %v279 = vld [vmem:[#allocation5 + $0x68] sm:$0xff]
        %v280 = vld [vmem:[#allocation5 + $0x70] sm:$0xff]
        %v281 = vld [vmem:[#allocation5 + $0x78] sm:$0xff]
        %282 = vmatprep.subr.mxu0 0.0
        %283 = vmatpush1.msra.mxu0 %v266
        %284 = vmatprep.subr.mxu0 0.0
        %285 = vmatpush1.msra.mxu0 %v267
        %286 = vmatprep.subr.mxu0 0.0
        %287 = vmatpush1.msra.mxu0 %v268
        %288 = vmatprep.subr.mxu0 0.0
        %289 = vmatpush1.msra.mxu0 %v269
        %290 = vmatprep.subr.mxu0 0.0
        %291 = vmatpush1.msra.mxu0 %v270
        %292 = vmatprep.subr.mxu0 0.0
        %293 = vmatpush1.msra.mxu0 %v271
        %294 = vmatprep.subr.mxu0 0.0
        %295 = vmatpush1.msra.mxu0 %v272
        %296 = vmatprep.subr.mxu0 0.0
        %297 = vmatpush1.msra.mxu0 %v273
        %298 = vmatprep.subr.mxu0 0.0
        %299 = vmatpush1.msra.mxu0 %v274
        %300 = vmatprep.subr.mxu0 0.0
        %301 = vmatpush1.msra.mxu0 %v275
        %302 = vmatprep.subr.mxu0 0.0
        %303 = vmatpush1.msra.mxu0 %v276
        %304 = vmatprep.subr.mxu0 0.0
        %305 = vmatpush1.msra.mxu0 %v277
        %306 = vmatprep.subr.mxu0 0.0
        %307 = vmatpush1.msra.mxu0 %v278
        %308 = vmatprep.subr.mxu0 0.0
        %309 = vmatpush1.msra.mxu0 %v279
        %310 = vmatprep.subr.mxu0 0.0
        %311 = vmatpush1.msra.mxu0 %v280
        %312 = vmatprep.subr.mxu0 0.0
        %313 = vmatpush1.msra.mxu0 %v281
        %314 = vmatprep.subr.mxu0 0.0
        %315 = vmatpush1.msra.mxu0 0.0
        %316 = vmatprep.subr.mxu0 0.0
        %317 = vmatpush1.msra.mxu0 0.0
        %318 = vmatprep.subr.mxu0 0.0
        %319 = vmatpush1.msra.mxu0 0.0
        %320 = vmatprep.subr.mxu0 0.0
        %321 = vmatpush1.msra.mxu0 0.0
        %322 = vmatprep.subr.mxu0 0.0
        %323 = vmatpush1.msra.mxu0 0.0
        %324 = vmatprep.subr.mxu0 0.0
        %325 = vmatpush1.msra.mxu0 0.0
        %326 = vmatprep.subr.mxu0 0.0
        %327 = vmatpush1.msra.mxu0 0.0
        %328 = vmatprep.subr.mxu0 0.0
        %329 = vmatpush1.msra.mxu0 0.0
        %330 = vmatprep.subr.mxu0 0.0
        %331 = vmatpush1.msra.mxu0 0.0
        %332 = vmatprep.subr.mxu0 0.0
        %333 = vmatpush1.msra.mxu0 0.0
        %334 = vmatprep.subr.mxu0 0.0
        %335 = vmatpush1.msra.mxu0 0.0
        %336 = vmatprep.subr.mxu0 0.0
        %337 = vmatpush1.msra.mxu0 0.0
        %338 = vmatprep.subr.mxu0 0.0
        %339 = vmatpush1.msra.mxu0 0.0
        %340 = vmatprep.subr.mxu0 0.0
        %341 = vmatpush1.msra.mxu0 0.0
        %342 = vmatprep.subr.mxu0 0.0
        %343 = vmatpush1.msra.mxu0 0.0
        %344 = vmatprep.subr.mxu0 0.0
        %345 = vmatpush1.msra.mxu0 0.0
        %346 = vmatprep.mubr.f32.mxu0 0.0
        %347 = vmatmul.mubr.f32.gmra.mrb[0].mxu0 %v262
        %v348 = vpop.f32.mrb[0].mxu0
        %v349 = vadd.f32 0.0, %v348
        %v350 = vpop.f32.mrb[0].mxu0
        %351 = vmatprep.mubr.f32.mxu0 0.0
        %352 = vmatmul.mubr.f32.gmra.mrb[0].mxu0 %v263
        %v353 = vpop.f32.mrb[0].mxu0
        %v354 = vadd.f32 0.0, %v353
        %v355 = vpop.f32.mrb[0].mxu0
        %356 = vmatprep.mubr.f32.mxu0 0.0
        %357 = vmatmul.mubr.f32.gmra.mrb[0].mxu0 %v264
        %v358 = vpop.f32.mrb[0].mxu0
        %v359 = vadd.f32 0.0, %v358
        %v360 = vpop.f32.mrb[0].mxu0
        %361 = vmatprep.mubr.f32.mxu0 0.0
        %362 = vmatmul.mubr.f32.gmra.mrb[0].mxu0 %v265
        %v363 = vpop.f32.mrb[0].mxu0
        %v364 = vadd.f32 0.0, %v363
        %v365 = vpop.f32.mrb[0].mxu0
        %366 = vdwg.mxu0
        %v367 = vld [vmem:[#allocation7] sm:$0xff]
        %v368 = vld [vmem:[#allocation7 + $0x8] sm:$0xff]
        %v369 = vld [vmem:[#allocation7 + $0x10] sm:$0xff]
        %v370 = vld [vmem:[#allocation7 + $0x18] sm:$0xff]
        %v371 = vld [vmem:[#allocation7 + $0x20] sm:$0xff]
        %v372 = vld [vmem:[#allocation7 + $0x28] sm:$0xff]
        %v373 = vld [vmem:[#allocation7 + $0x30] sm:$0xff]
        %v374 = vld [vmem:[#allocation7 + $0x38] sm:$0xff]
        %v375 = vld [vmem:[#allocation7 + $0x40] sm:$0xff]
        %v376 = vld [vmem:[#allocation7 + $0x48] sm:$0xff]
        %v377 = vld [vmem:[#allocation7 + $0x50] sm:$0xff]
        %v378 = vld [vmem:[#allocation7 + $0x58] sm:$0xff]
        %v379 = vld [vmem:[#allocation7 + $0x60] sm:$0xff]
        %v380 = vld [vmem:[#allocation7 + $0x68] sm:$0xff]
        %v381 = vld [vmem:[#allocation7 + $0x70] sm:$0xff]
        %v382 = vld [vmem:[#allocation7 + $0x78] sm:$0xff]
        %v383 = vld [vmem:[#allocation7 + $0x80] sm:$0xff]
        %v384 = vld [vmem:[#allocation7 + $0x88] sm:$0xff]
        %v385 = vld [vmem:[#allocation7 + $0x90] sm:$0xff]
        %v386 = vld [vmem:[#allocation7 + $0x98] sm:$0xff]
        %v387 = vld [vmem:[#allocation7 + $0xa0] sm:$0xff]
        %v388 = vld [vmem:[#allocation7 + $0xa8] sm:$0xff]
        %v389 = vld [vmem:[#allocation7 + $0xb0] sm:$0xff]
        %v390 = vld [vmem:[#allocation7 + $0xb8] sm:$0xff]
        %v391 = vld [vmem:[#allocation7 + $0xc0] sm:$0xff]
        %v392 = vld [vmem:[#allocation7 + $0xc8] sm:$0xff]
        %v393 = vld [vmem:[#allocation7 + $0xd0] sm:$0xff]
        %v394 = vld [vmem:[#allocation7 + $0xd8] sm:$0xff]
        %v395 = vld [vmem:[#allocation7 + $0xe0] sm:$0xff]
        %v396 = vld [vmem:[#allocation7 + $0xe8] sm:$0xff]
        %v397 = vld [vmem:[#allocation7 + $0xf0] sm:$0xff]
        %v398 = vld [vmem:[#allocation7 + $0xf8] sm:$0xff]
        %v399 = vld [vmem:[#allocation7 + $0x100] sm:$0xff]
        %v400 = vld [vmem:[#allocation7 + $0x108] sm:$0xff]
        %v401 = vld [vmem:[#allocation7 + $0x110] sm:$0xff]
        %v402 = vld [vmem:[#allocation7 + $0x118] sm:$0xff]
        %v403 = vld [vmem:[#allocation7 + $0x120] sm:$0xff]
        %v404 = vld [vmem:[#allocation7 + $0x128] sm:$0xff]
        %v405 = vld [vmem:[#allocation7 + $0x130] sm:$0xff]
        %v406 = vld [vmem:[#allocation7 + $0x138] sm:$0xff]
        %v407 = vld [vmem:[#allocation7 + $0x140] sm:$0xff]
        %v408 = vld [vmem:[#allocation7 + $0x148] sm:$0xff]
        %v409 = vld [vmem:[#allocation7 + $0x150] sm:$0xff]
        %v410 = vld [vmem:[#allocation7 + $0x158] sm:$0xff]
        %v411 = vld [vmem:[#allocation7 + $0x160] sm:$0xff]
        %v412 = vld [vmem:[#allocation7 + $0x168] sm:$0xff]
        %v413 = vld [vmem:[#allocation7 + $0x170] sm:$0xff]
        %v414 = vld [vmem:[#allocation7 + $0x178] sm:$0xff]
        %v415 = vld [vmem:[#allocation7 + $0x180] sm:$0xff]
        %v416 = vld [vmem:[#allocation7 + $0x188] sm:$0xff]
        %v417 = vld [vmem:[#allocation7 + $0x190] sm:$0xff]
        %v418 = vld [vmem:[#allocation7 + $0x198] sm:$0xff]
        %v419 = vld [vmem:[#allocation7 + $0x1a0] sm:$0xff]
        %v420 = vld [vmem:[#allocation7 + $0x1a8] sm:$0xff]
        %v421 = vld [vmem:[#allocation7 + $0x1b0] sm:$0xff]
        %v422 = vld [vmem:[#allocation7 + $0x1b8] sm:$0xff]
        %v423 = vld [vmem:[#allocation7 + $0x1c0] sm:$0xff]
        %v424 = vld [vmem:[#allocation7 + $0x1c8] sm:$0xff]
        %v425 = vld [vmem:[#allocation7 + $0x1d0] sm:$0xff]
        %v426 = vld [vmem:[#allocation7 + $0x1d8] sm:$0xff]
        %v427 = vld [vmem:[#allocation7 + $0x1e0] sm:$0xff]
        %v428 = vld [vmem:[#allocation7 + $0x1e8] sm:$0xff]
        %v429 = vld [vmem:[#allocation7 + $0x1f0] sm:$0xff]
        %v430 = vld [vmem:[#allocation7 + $0x1f8] sm:$0xff]
        %v431 = vld [vmem:[#allocation7 + $0x200] sm:$0xff]
        %v432 = vld [vmem:[#allocation7 + $0x208] sm:$0xff]
        %v433 = vld [vmem:[#allocation7 + $0x210] sm:$0xff]
        %v434 = vld [vmem:[#allocation7 + $0x218] sm:$0xff]
        %v435 = vld [vmem:[#allocation7 + $0x220] sm:$0xff]
        %v436 = vld [vmem:[#allocation7 + $0x228] sm:$0xff]
        %v437 = vld [vmem:[#allocation7 + $0x230] sm:$0xff]
        %v438 = vld [vmem:[#allocation7 + $0x238] sm:$0xff]
        %v439 = vld [vmem:[#allocation7 + $0x240] sm:$0xff]
        %v440 = vld [vmem:[#allocation7 + $0x248] sm:$0xff]
        %v441 = vld [vmem:[#allocation7 + $0x250] sm:$0xff]
        %v442 = vld [vmem:[#allocation7 + $0x258] sm:$0xff]
        %v443 = vld [vmem:[#allocation7 + $0x260] sm:$0xff]
        %v444 = vld [vmem:[#allocation7 + $0x268] sm:$0xff]
        %v445 = vld [vmem:[#allocation7 + $0x270] sm:$0xff]
        %v446 = vld [vmem:[#allocation7 + $0x278] sm:$0xff]
        %v447 = vld [vmem:[#allocation7 + $0x280] sm:$0xff]
        %v448 = vld [vmem:[#allocation7 + $0x288] sm:$0xff]
        %v449 = vld [vmem:[#allocation7 + $0x290] sm:$0xff]
        %v450 = vld [vmem:[#allocation7 + $0x298] sm:$0xff]
        %v451 = vld [vmem:[#allocation7 + $0x2a0] sm:$0xff]
        %v452 = vld [vmem:[#allocation7 + $0x2a8] sm:$0xff]
        %v453 = vld [vmem:[#allocation7 + $0x2b0] sm:$0xff]
        %v454 = vld [vmem:[#allocation7 + $0x2b8] sm:$0xff]
        %v455 = vld [vmem:[#allocation7 + $0x2c0] sm:$0xff]
        %v456 = vld [vmem:[#allocation7 + $0x2c8] sm:$0xff]
        %v457 = vld [vmem:[#allocation7 + $0x2d0] sm:$0xff]
        %v458 = vld [vmem:[#allocation7 + $0x2d8] sm:$0xff]
        %v459 = vld [vmem:[#allocation7 + $0x2e0] sm:$0xff]
        %v460 = vld [vmem:[#allocation7 + $0x2e8] sm:$0xff]
        %v461 = vld [vmem:[#allocation7 + $0x2f0] sm:$0xff]
        %v462 = vld [vmem:[#allocation7 + $0x2f8] sm:$0xff]
        %v463 = vld [vmem:[#allocation7 + $0x300] sm:$0xff]
        %v464 = vld [vmem:[#allocation7 + $0x308] sm:$0xff]
        %v465 = vld [vmem:[#allocation7 + $0x310] sm:$0xff]
        %v466 = vld [vmem:[#allocation7 + $0x318] sm:$0xff]
        %v467 = vld [vmem:[#allocation7 + $0x320] sm:$0xff]
        %v468 = vld [vmem:[#allocation7 + $0x328] sm:$0xff]
        %v469 = vld [vmem:[#allocation7 + $0x330] sm:$0xff]
        %v470 = vld [vmem:[#allocation7 + $0x338] sm:$0xff]
        %v471 = vld [vmem:[#allocation7 + $0x340] sm:$0xff]
        %v472 = vld [vmem:[#allocation7 + $0x348] sm:$0xff]
        %v473 = vld [vmem:[#allocation7 + $0x350] sm:$0xff]
        %v474 = vld [vmem:[#allocation7 + $0x358] sm:$0xff]
        %v475 = vld [vmem:[#allocation7 + $0x360] sm:$0xff]
        %v476 = vld [vmem:[#allocation7 + $0x368] sm:$0xff]
        %v477 = vld [vmem:[#allocation7 + $0x370] sm:$0xff]
        %v478 = vld [vmem:[#allocation7 + $0x378] sm:$0xff]
        %v479 = vld [vmem:[#allocation7 + $0x380] sm:$0xff]
        %v480 = vld [vmem:[#allocation7 + $0x388] sm:$0xff]
        %v481 = vld [vmem:[#allocation7 + $0x390] sm:$0xff]
        %v482 = vld [vmem:[#allocation7 + $0x398] sm:$0xff]
        %v483 = vld [vmem:[#allocation7 + $0x3a0] sm:$0xff]
        %v484 = vld [vmem:[#allocation7 + $0x3a8] sm:$0xff]
        %v485 = vld [vmem:[#allocation7 + $0x3b0] sm:$0xff]
        %v486 = vld [vmem:[#allocation7 + $0x3b8] sm:$0xff]
        %v487 = vld [vmem:[#allocation7 + $0x3c0] sm:$0xff]
        %v488 = vld [vmem:[#allocation7 + $0x3c8] sm:$0xff]
        %v489 = vld [vmem:[#allocation7 + $0x3d0] sm:$0xff]
        %v490 = vld [vmem:[#allocation7 + $0x3d8] sm:$0xff]
        %v491 = vld [vmem:[#allocation7 + $0x3e0] sm:$0xff]
        %v492 = vld [vmem:[#allocation7 + $0x3e8] sm:$0xff]
        %v493 = vld [vmem:[#allocation7 + $0x3f0] sm:$0xff]
        %v494 = vld [vmem:[#allocation7 + $0x3f8] sm:$0xff]
        %v495 = vld [vmem:[#allocation8] sm:$0xff]
        %v496 = vld [vmem:[#allocation8 + $0x8] sm:$0xff]
        %v497 = vld [vmem:[#allocation8 + $0x10] sm:$0xff]
        %v498 = vld [vmem:[#allocation8 + $0x18] sm:$0xff]
        %v499 = vld [vmem:[#allocation8 + $0x20] sm:$0xff]
        %v500 = vld [vmem:[#allocation8 + $0x28] sm:$0xff]
        %v501 = vld [vmem:[#allocation8 + $0x30] sm:$0xff]
        %v502 = vld [vmem:[#allocation8 + $0x38] sm:$0xff]
        %v504 = vcombine.high %v349, %v349
        %v506 = vunpack.c.l.s4 1966171168
        %v507 = vunpack.c.0.s8 %v506
        %v508 = vlaneseq
        %v509 = vshrl.u32 %v508, 7
        %v510 = vsub.s32 %v507, %v509
        %v511 = vrot.slane %v349, %v510
        %v513 = vunpack.c.l.s4 1966171168
        %v514 = vunpack.c.0.s8 %v513
        %v515 = vlaneseq
        %v516 = vshrl.u32 %v515, 7
        %v517 = vsub.s32 %v514, %v516
        %v518 = vrot.slane %v504, %v517
        %v519 = vcombine.high %v511, %v511
        %v520 = vcombine.high %v518, %v518
        %v522 = vunpack.c.l.s4 1966171168
        %v523 = vunpack.c.0.s8 %v522
        %v524 = vlaneseq
        %v525 = vshrl.u32 %v524, 7
        %v526 = vsub.s32 %v523, %v525
        %v527 = vrot.slane %v511, %v526
        %v529 = vunpack.c.l.s4 1966171168
        %v530 = vunpack.c.0.s8 %v529
        %v531 = vlaneseq
        %v532 = vshrl.u32 %v531, 7
        %v533 = vsub.s32 %v530, %v532
        %v534 = vrot.slane %v518, %v533
        %v536 = vunpack.c.l.s4 1966171168
        %v537 = vunpack.c.0.s8 %v536
        %v538 = vlaneseq
        %v539 = vshrl.u32 %v538, 7
        %v540 = vsub.s32 %v537, %v539
        %v541 = vrot.slane %v519, %v540
        %v543 = vunpack.c.l.s4 1966171168
        %v544 = vunpack.c.0.s8 %v543
        %v545 = vlaneseq
        %v546 = vshrl.u32 %v545, 7
        %v547 = vsub.s32 %v544, %v546
        %v548 = vrot.slane %v520, %v547
        %v549 = vcombine.high %v527, %v527
        %v550 = vcombine.high %v534, %v534
        %v551 = vcombine.high %v541, %v541
        %v552 = vcombine.high %v548, %v548
        %v553 = vlaneseq
        %v554 = vshrl.u32 %v553, 7
        %v555 = vsub.s32 0, %v554
        %v556 = vrot.slane %v527, %v555
        %v557 = vlaneseq
        %v558 = vshrl.u32 %v557, 7
        %v559 = vsub.s32 0, %v558
        %v560 = vrot.slane %v541, %v559
        %v561 = vlaneseq
        %v562 = vshrl.u32 %v561, 7
        %v563 = vsub.s32 0, %v562
        %v564 = vrot.slane %v549, %v563
        %v565 = vlaneseq
        %v566 = vshrl.u32 %v565, 7
        %v567 = vsub.s32 0, %v566
        %v568 = vrot.slane %v551, %v567
        %v569 = vlaneseq
        %v570 = vshrl.u32 %v569, 7
        %v571 = vsub.s32 0, %v570
        %v572 = vrot.slane %v534, %v571
        %v573 = vlaneseq
        %v574 = vshrl.u32 %v573, 7
        %v575 = vsub.s32 0, %v574
        %v576 = vrot.slane %v548, %v575
        %v577 = vlaneseq
        %v578 = vshrl.u32 %v577, 7
        %v579 = vsub.s32 0, %v578
        %v580 = vrot.slane %v550, %v579
        %v581 = vlaneseq
        %v582 = vshrl.u32 %v581, 7
        %v583 = vsub.s32 0, %v582
        %v584 = vrot.slane %v552, %v583
        %v593 = vmul.f32 %v556, %v367
        %v594 = vmul.f32 %v556, %v368
        %v595 = vmul.f32 %v556, %v369
        %v596 = vmul.f32 %v556, %v370
        %v597 = vmul.f32 %v560, %v371
        %v598 = vmul.f32 %v560, %v372
        %v599 = vmul.f32 %v560, %v373
        %v600 = vmul.f32 %v560, %v374
        %v601 = vmul.f32 %v564, %v375
        %v602 = vmul.f32 %v564, %v376
        %v603 = vmul.f32 %v564, %v377
        %v604 = vmul.f32 %v564, %v378
        %v605 = vmul.f32 %v568, %v379
        %v606 = vmul.f32 %v568, %v380
        %v607 = vmul.f32 %v568, %v381
        %v608 = vmul.f32 %v568, %v382
        %v609 = vmul.f32 %v572, %v383
        %v610 = vmul.f32 %v572, %v384
        %v611 = vmul.f32 %v572, %v385
        %v612 = vmul.f32 %v572, %v386
        %v613 = vmul.f32 %v576, %v387
        %v614 = vmul.f32 %v576, %v388
        %v615 = vmul.f32 %v576, %v389
        %v616 = vmul.f32 %v576, %v390
        %v617 = vmul.f32 %v580, %v391
        %v618 = vmul.f32 %v580, %v392
        %v619 = vmul.f32 %v580, %v393
        %v620 = vmul.f32 %v580, %v394
        %v621 = vmul.f32 %v584, %v395
        %v622 = vmul.f32 %v584, %v396
        %v623 = vmul.f32 %v584, %v397
        %v624 = vmul.f32 %v584, %v398
        %vm625 = vcmask 523264
        %v626 = vsel %vm625, %v593, 0.0
        %v627 = vsel %vm625, %v597, 0.0
        %v628 = vadd.f32 %v626, %v627
        %v629 = vsel %vm625, %v601, 0.0
        %v630 = vadd.f32 %v628, %v629
        %v631 = vsel %vm625, %v605, 0.0
        %v632 = vadd.f32 %v630, %v631
        %v633 = vsel %vm625, %v609, 0.0
        %v634 = vadd.f32 %v632, %v633
        %v635 = vsel %vm625, %v613, 0.0
        %v636 = vadd.f32 %v634, %v635
        %v637 = vsel %vm625, %v617, 0.0
        %v638 = vadd.f32 %v636, %v637
        %v639 = vsel %vm625, %v621, 0.0
        %v640 = vadd.f32 %v638, %v639
        %v641 = vsel %vm625, %v594, 0.0
        %v642 = vsel %vm625, %v598, 0.0
        %v643 = vadd.f32 %v641, %v642
        %v644 = vsel %vm625, %v602, 0.0
        %v645 = vadd.f32 %v643, %v644
        %v646 = vsel %vm625, %v606, 0.0
        %v647 = vadd.f32 %v645, %v646
        %v648 = vsel %vm625, %v610, 0.0
        %v649 = vadd.f32 %v647, %v648
        %v650 = vsel %vm625, %v614, 0.0
        %v651 = vadd.f32 %v649, %v650
        %v652 = vsel %vm625, %v618, 0.0
        %v653 = vadd.f32 %v651, %v652
        %v654 = vsel %vm625, %v622, 0.0
        %v655 = vadd.f32 %v653, %v654
        %v656 = vsel %vm625, %v595, 0.0
        %v657 = vsel %vm625, %v599, 0.0
        %v658 = vadd.f32 %v656, %v657
        %v659 = vsel %vm625, %v603, 0.0
        %v660 = vadd.f32 %v658, %v659
        %v661 = vsel %vm625, %v607, 0.0
        %v662 = vadd.f32 %v660, %v661
        %v663 = vsel %vm625, %v611, 0.0
        %v664 = vadd.f32 %v662, %v663
        %v665 = vsel %vm625, %v615, 0.0
        %v666 = vadd.f32 %v664, %v665
        %v667 = vsel %vm625, %v619, 0.0
        %v668 = vadd.f32 %v666, %v667
        %v669 = vsel %vm625, %v623, 0.0
        %v670 = vadd.f32 %v668, %v669
        %v671 = vsel %vm625, %v596, 0.0
        %v672 = vsel %vm625, %v600, 0.0
        %v673 = vadd.f32 %v671, %v672
        %v674 = vsel %vm625, %v604, 0.0
        %v675 = vadd.f32 %v673, %v674
        %v676 = vsel %vm625, %v608, 0.0
        %v677 = vadd.f32 %v675, %v676
        %v678 = vsel %vm625, %v612, 0.0
        %v679 = vadd.f32 %v677, %v678
        %v680 = vsel %vm625, %v616, 0.0
        %v681 = vadd.f32 %v679, %v680
        %v682 = vsel %vm625, %v620, 0.0
        %v683 = vadd.f32 %v681, %v682
        %v684 = vsel %vm625, %v624, 0.0
        %v685 = vadd.f32 %v683, %v684
        %v686 = vadd.f32 %v640, 0.0
        %v687 = vadd.f32 %v655, 0.0
        %v688 = vadd.f32 %v670, 0.0
        %v689 = vadd.f32 %v685, 0.0
        %v691 = vcombine.high %v354, %v354
        %v693 = vunpack.c.l.s4 1966171168
        %v694 = vunpack.c.0.s8 %v693
        %v695 = vlaneseq
        %v696 = vshrl.u32 %v695, 7
        %v697 = vsub.s32 %v694, %v696
        %v698 = vrot.slane %v354, %v697
        %v700 = vunpack.c.l.s4 1966171168
        %v701 = vunpack.c.0.s8 %v700
        %v702 = vlaneseq
        %v703 = vshrl.u32 %v702, 7
        %v704 = vsub.s32 %v701, %v703
        %v705 = vrot.slane %v691, %v704
        %v706 = vcombine.high %v698, %v698
        %v707 = vcombine.high %v705, %v705
        %v709 = vunpack.c.l.s4 1966171168
        %v710 = vunpack.c.0.s8 %v709
        %v711 = vlaneseq
        %v712 = vshrl.u32 %v711, 7
        %v713 = vsub.s32 %v710, %v712
        %v714 = vrot.slane %v698, %v713
        %v716 = vunpack.c.l.s4 1966171168
        %v717 = vunpack.c.0.s8 %v716
        %v718 = vlaneseq
        %v719 = vshrl.u32 %v718, 7
        %v720 = vsub.s32 %v717, %v719
        %v721 = vrot.slane %v705, %v720
        %v723 = vunpack.c.l.s4 1966171168
        %v724 = vunpack.c.0.s8 %v723
        %v725 = vlaneseq
        %v726 = vshrl.u32 %v725, 7
        %v727 = vsub.s32 %v724, %v726
        %v728 = vrot.slane %v706, %v727
        %v730 = vunpack.c.l.s4 1966171168
        %v731 = vunpack.c.0.s8 %v730
        %v732 = vlaneseq
        %v733 = vshrl.u32 %v732, 7
        %v734 = vsub.s32 %v731, %v733
        %v735 = vrot.slane %v707, %v734
        %v736 = vcombine.high %v714, %v714
        %v737 = vcombine.high %v721, %v721
        %v738 = vcombine.high %v728, %v728
        %v739 = vcombine.high %v735, %v735
        %v740 = vlaneseq
        %v741 = vshrl.u32 %v740, 7
        %v742 = vsub.s32 0, %v741
        %v743 = vrot.slane %v714, %v742
        %v744 = vlaneseq
        %v745 = vshrl.u32 %v744, 7
        %v746 = vsub.s32 0, %v745
        %v747 = vrot.slane %v728, %v746
        %v748 = vlaneseq
        %v749 = vshrl.u32 %v748, 7
        %v750 = vsub.s32 0, %v749
        %v751 = vrot.slane %v736, %v750
        %v752 = vlaneseq
        %v753 = vshrl.u32 %v752, 7
        %v754 = vsub.s32 0, %v753
        %v755 = vrot.slane %v738, %v754
        %v756 = vlaneseq
        %v757 = vshrl.u32 %v756, 7
        %v758 = vsub.s32 0, %v757
        %v759 = vrot.slane %v721, %v758
        %v760 = vlaneseq
        %v761 = vshrl.u32 %v760, 7
        %v762 = vsub.s32 0, %v761
        %v763 = vrot.slane %v735, %v762
        %v764 = vlaneseq
        %v765 = vshrl.u32 %v764, 7
        %v766 = vsub.s32 0, %v765
        %v767 = vrot.slane %v737, %v766
        %v768 = vlaneseq
        %v769 = vshrl.u32 %v768, 7
        %v770 = vsub.s32 0, %v769
        %v771 = vrot.slane %v739, %v770
        %v780 = vmul.f32 %v743, %v399
        %v781 = vmul.f32 %v743, %v400
        %v782 = vmul.f32 %v743, %v401
        %v783 = vmul.f32 %v743, %v402
        %v784 = vmul.f32 %v747, %v403
        %v785 = vmul.f32 %v747, %v404
        %v786 = vmul.f32 %v747, %v405
        %v787 = vmul.f32 %v747, %v406
        %v788 = vmul.f32 %v751, %v407
        %v789 = vmul.f32 %v751, %v408
        %v790 = vmul.f32 %v751, %v409
        %v791 = vmul.f32 %v751, %v410
        %v792 = vmul.f32 %v755, %v411
        %v793 = vmul.f32 %v755, %v412
        %v794 = vmul.f32 %v755, %v413
        %v795 = vmul.f32 %v755, %v414
        %v796 = vmul.f32 %v759, %v415
        %v797 = vmul.f32 %v759, %v416
        %v798 = vmul.f32 %v759, %v417
        %v799 = vmul.f32 %v759, %v418
        %v800 = vmul.f32 %v763, %v419
        %v801 = vmul.f32 %v763, %v420
        %v802 = vmul.f32 %v763, %v421
        %v803 = vmul.f32 %v763, %v422
        %v804 = vmul.f32 %v767, %v423
        %v805 = vmul.f32 %v767, %v424
        %v806 = vmul.f32 %v767, %v425
        %v807 = vmul.f32 %v767, %v426
        %v808 = vmul.f32 %v771, %v427
        %v809 = vmul.f32 %v771, %v428
        %v810 = vmul.f32 %v771, %v429
        %v811 = vmul.f32 %v771, %v430
        %v812 = vsel %vm625, %v780, 0.0
        %v813 = vsel %vm625, %v784, 0.0
        %v814 = vadd.f32 %v812, %v813
        %v815 = vsel %vm625, %v788, 0.0
        %v816 = vadd.f32 %v814, %v815
        %v817 = vsel %vm625, %v792, 0.0
        %v818 = vadd.f32 %v816, %v817
        %v819 = vsel %vm625, %v796, 0.0
        %v820 = vadd.f32 %v818, %v819
        %v821 = vsel %vm625, %v800, 0.0
        %v822 = vadd.f32 %v820, %v821
        %v823 = vsel %vm625, %v804, 0.0
        %v824 = vadd.f32 %v822, %v823
        %v825 = vsel %vm625, %v808, 0.0
        %v826 = vadd.f32 %v824, %v825
        %v827 = vsel %vm625, %v781, 0.0
        %v828 = vsel %vm625, %v785, 0.0
        %v829 = vadd.f32 %v827, %v828
        %v830 = vsel %vm625, %v789, 0.0
        %v831 = vadd.f32 %v829, %v830
        %v832 = vsel %vm625, %v793, 0.0
        %v833 = vadd.f32 %v831, %v832
        %v834 = vsel %vm625, %v797, 0.0
        %v835 = vadd.f32 %v833, %v834
        %v836 = vsel %vm625, %v801, 0.0
        %v837 = vadd.f32 %v835, %v836
        %v838 = vsel %vm625, %v805, 0.0
        %v839 = vadd.f32 %v837, %v838
        %v840 = vsel %vm625, %v809, 0.0
        %v841 = vadd.f32 %v839, %v840
        %v842 = vsel %vm625, %v782, 0.0
        %v843 = vsel %vm625, %v786, 0.0
        %v844 = vadd.f32 %v842, %v843
        %v845 = vsel %vm625, %v790, 0.0
        %v846 = vadd.f32 %v844, %v845
        %v847 = vsel %vm625, %v794, 0.0
        %v848 = vadd.f32 %v846, %v847
        %v849 = vsel %vm625, %v798, 0.0
        %v850 = vadd.f32 %v848, %v849
        %v851 = vsel %vm625, %v802, 0.0
        %v852 = vadd.f32 %v850, %v851
        %v853 = vsel %vm625, %v806, 0.0
        %v854 = vadd.f32 %v852, %v853
        %v855 = vsel %vm625, %v810, 0.0
        %v856 = vadd.f32 %v854, %v855
        %v857 = vsel %vm625, %v783, 0.0
        %v858 = vsel %vm625, %v787, 0.0
        %v859 = vadd.f32 %v857, %v858
        %v860 = vsel %vm625, %v791, 0.0
        %v861 = vadd.f32 %v859, %v860
        %v862 = vsel %vm625, %v795, 0.0
        %v863 = vadd.f32 %v861, %v862
        %v864 = vsel %vm625, %v799, 0.0
        %v865 = vadd.f32 %v863, %v864
        %v866 = vsel %vm625, %v803, 0.0
        %v867 = vadd.f32 %v865, %v866
        %v868 = vsel %vm625, %v807, 0.0
        %v869 = vadd.f32 %v867, %v868
        %v870 = vsel %vm625, %v811, 0.0
        %v871 = vadd.f32 %v869, %v870
        %v872 = vadd.f32 %v686, %v826
        %v873 = vadd.f32 %v687, %v841
        %v874 = vadd.f32 %v688, %v856
        %v875 = vadd.f32 %v689, %v871
        %v877 = vcombine.high %v359, %v359
        %v879 = vunpack.c.l.s4 1966171168
        %v880 = vunpack.c.0.s8 %v879
        %v881 = vlaneseq
        %v882 = vshrl.u32 %v881, 7
        %v883 = vsub.s32 %v880, %v882
        %v884 = vrot.slane %v359, %v883
        %v886 = vunpack.c.l.s4 1966171168
        %v887 = vunpack.c.0.s8 %v886
        %v888 = vlaneseq
        %v889 = vshrl.u32 %v888, 7
        %v890 = vsub.s32 %v887, %v889
        %v891 = vrot.slane %v877, %v890
        %v892 = vcombine.high %v884, %v884
        %v893 = vcombine.high %v891, %v891
        %v895 = vunpack.c.l.s4 1966171168
        %v896 = vunpack.c.0.s8 %v895
        %v897 = vlaneseq
        %v898 = vshrl.u32 %v897, 7
        %v899 = vsub.s32 %v896, %v898
        %v900 = vrot.slane %v884, %v899
        %v902 = vunpack.c.l.s4 1966171168
        %v903 = vunpack.c.0.s8 %v902
        %v904 = vlaneseq
        %v905 = vshrl.u32 %v904, 7
        %v906 = vsub.s32 %v903, %v905
        %v907 = vrot.slane %v891, %v906
        %v909 = vunpack.c.l.s4 1966171168
        %v910 = vunpack.c.0.s8 %v909
        %v911 = vlaneseq
        %v912 = vshrl.u32 %v911, 7
        %v913 = vsub.s32 %v910, %v912
        %v914 = vrot.slane %v892, %v913
        %v916 = vunpack.c.l.s4 1966171168
        %v917 = vunpack.c.0.s8 %v916
        %v918 = vlaneseq
        %v919 = vshrl.u32 %v918, 7
        %v920 = vsub.s32 %v917, %v919
        %v921 = vrot.slane %v893, %v920
        %v922 = vcombine.high %v900, %v900
        %v923 = vcombine.high %v907, %v907
        %v924 = vcombine.high %v914, %v914
        %v925 = vcombine.high %v921, %v921
        %v926 = vlaneseq
        %v927 = vshrl.u32 %v926, 7
        %v928 = vsub.s32 0, %v927
        %v929 = vrot.slane %v900, %v928
        %v930 = vlaneseq
        %v931 = vshrl.u32 %v930, 7
        %v932 = vsub.s32 0, %v931
        %v933 = vrot.slane %v914, %v932
        %v934 = vlaneseq
        %v935 = vshrl.u32 %v934, 7
        %v936 = vsub.s32 0, %v935
        %v937 = vrot.slane %v922, %v936
        %v938 = vlaneseq
        %v939 = vshrl.u32 %v938, 7
        %v940 = vsub.s32 0, %v939
        %v941 = vrot.slane %v924, %v940
        %v942 = vlaneseq
        %v943 = vshrl.u32 %v942, 7
        %v944 = vsub.s32 0, %v943
        %v945 = vrot.slane %v907, %v944
        %v946 = vlaneseq
        %v947 = vshrl.u32 %v946, 7
        %v948 = vsub.s32 0, %v947
        %v949 = vrot.slane %v921, %v948
        %v950 = vlaneseq
        %v951 = vshrl.u32 %v950, 7
        %v952 = vsub.s32 0, %v951
        %v953 = vrot.slane %v923, %v952
        %v954 = vlaneseq
        %v955 = vshrl.u32 %v954, 7
        %v956 = vsub.s32 0, %v955
        %v957 = vrot.slane %v925, %v956
        %v966 = vmul.f32 %v929, %v431
        %v967 = vmul.f32 %v929, %v432
        %v968 = vmul.f32 %v929, %v433
        %v969 = vmul.f32 %v929, %v434
        %v970 = vmul.f32 %v933, %v435
        %v971 = vmul.f32 %v933, %v436
        %v972 = vmul.f32 %v933, %v437
        %v973 = vmul.f32 %v933, %v438
        %v974 = vmul.f32 %v937, %v439
        %v975 = vmul.f32 %v937, %v440
        %v976 = vmul.f32 %v937, %v441
        %v977 = vmul.f32 %v937, %v442
        %v978 = vmul.f32 %v941, %v443
        %v979 = vmul.f32 %v941, %v444
        %v980 = vmul.f32 %v941, %v445
        %v981 = vmul.f32 %v941, %v446
        %v982 = vmul.f32 %v945, %v447
        %v983 = vmul.f32 %v945, %v448
        %v984 = vmul.f32 %v945, %v449
        %v985 = vmul.f32 %v945, %v450
        %v986 = vmul.f32 %v949, %v451
        %v987 = vmul.f32 %v949, %v452
        %v988 = vmul.f32 %v949, %v453
        %v989 = vmul.f32 %v949, %v454
        %v990 = vmul.f32 %v953, %v455
        %v991 = vmul.f32 %v953, %v456
        %v992 = vmul.f32 %v953, %v457
        %v993 = vmul.f32 %v953, %v458
        %v994 = vmul.f32 %v957, %v459
        %v995 = vmul.f32 %v957, %v460
        %v996 = vmul.f32 %v957, %v461
        %v997 = vmul.f32 %v957, %v462
        %v998 = vsel %vm625, %v966, 0.0
        %v999 = vsel %vm625, %v970, 0.0
        %v1000 = vadd.f32 %v998, %v999
        %v1001 = vsel %vm625, %v974, 0.0
        %v1002 = vadd.f32 %v1000, %v1001
        %v1003 = vsel %vm625, %v978, 0.0
        %v1004 = vadd.f32 %v1002, %v1003
        %v1005 = vsel %vm625, %v982, 0.0
        %v1006 = vadd.f32 %v1004, %v1005
        %v1007 = vsel %vm625, %v986, 0.0
        %v1008 = vadd.f32 %v1006, %v1007
        %v1009 = vsel %vm625, %v990, 0.0
        %v1010 = vadd.f32 %v1008, %v1009
        %v1011 = vsel %vm625, %v994, 0.0
        %v1012 = vadd.f32 %v1010, %v1011
        %v1013 = vsel %vm625, %v967, 0.0
        %v1014 = vsel %vm625, %v971, 0.0
        %v1015 = vadd.f32 %v1013, %v1014
        %v1016 = vsel %vm625, %v975, 0.0
        %v1017 = vadd.f32 %v1015, %v1016
        %v1018 = vsel %vm625, %v979, 0.0
        %v1019 = vadd.f32 %v1017, %v1018
        %v1020 = vsel %vm625, %v983, 0.0
        %v1021 = vadd.f32 %v1019, %v1020
        %v1022 = vsel %vm625, %v987, 0.0
        %v1023 = vadd.f32 %v1021, %v1022
        %v1024 = vsel %vm625, %v991, 0.0
        %v1025 = vadd.f32 %v1023, %v1024
        %v1026 = vsel %vm625, %v995, 0.0
        %v1027 = vadd.f32 %v1025, %v1026
        %v1028 = vsel %vm625, %v968, 0.0
        %v1029 = vsel %vm625, %v972, 0.0
        %v1030 = vadd.f32 %v1028, %v1029
        %v1031 = vsel %vm625, %v976, 0.0
        %v1032 = vadd.f32 %v1030, %v1031
        %v1033 = vsel %vm625, %v980, 0.0
        %v1034 = vadd.f32 %v1032, %v1033
        %v1035 = vsel %vm625, %v984, 0.0
        %v1036 = vadd.f32 %v1034, %v1035
        %v1037 = vsel %vm625, %v988, 0.0
        %v1038 = vadd.f32 %v1036, %v1037
        %v1039 = vsel %vm625, %v992, 0.0
        %v1040 = vadd.f32 %v1038, %v1039
        %v1041 = vsel %vm625, %v996, 0.0
        %v1042 = vadd.f32 %v1040, %v1041
        %v1043 = vsel %vm625, %v969, 0.0
        %v1044 = vsel %vm625, %v973, 0.0
        %v1045 = vadd.f32 %v1043, %v1044
        %v1046 = vsel %vm625, %v977, 0.0
        %v1047 = vadd.f32 %v1045, %v1046
        %v1048 = vsel %vm625, %v981, 0.0
        %v1049 = vadd.f32 %v1047, %v1048
        %v1050 = vsel %vm625, %v985, 0.0
        %v1051 = vadd.f32 %v1049, %v1050
        %v1052 = vsel %vm625, %v989, 0.0
        %v1053 = vadd.f32 %v1051, %v1052
        %v1054 = vsel %vm625, %v993, 0.0
        %v1055 = vadd.f32 %v1053, %v1054
        %v1056 = vsel %vm625, %v997, 0.0
        %v1057 = vadd.f32 %v1055, %v1056
        %v1058 = vadd.f32 %v872, %v1012
        %v1059 = vadd.f32 %v873, %v1027
        %v1060 = vadd.f32 %v874, %v1042
        %v1061 = vadd.f32 %v875, %v1057
        %v1063 = vcombine.high %v364, %v364
        %v1065 = vunpack.c.l.s4 1966171168
        %v1066 = vunpack.c.0.s8 %v1065
        %v1067 = vlaneseq
        %v1068 = vshrl.u32 %v1067, 7
        %v1069 = vsub.s32 %v1066, %v1068
        %v1070 = vrot.slane %v364, %v1069
        %v1072 = vunpack.c.l.s4 1966171168
        %v1073 = vunpack.c.0.s8 %v1072
        %v1074 = vlaneseq
        %v1075 = vshrl.u32 %v1074, 7
        %v1076 = vsub.s32 %v1073, %v1075
        %v1077 = vrot.slane %v1063, %v1076
        %v1078 = vcombine.high %v1070, %v1070
        %v1079 = vcombine.high %v1077, %v1077
        %v1081 = vunpack.c.l.s4 1966171168
        %v1082 = vunpack.c.0.s8 %v1081
        %v1083 = vlaneseq
        %v1084 = vshrl.u32 %v1083, 7
        %v1085 = vsub.s32 %v1082, %v1084
        %v1086 = vrot.slane %v1070, %v1085
        %v1088 = vunpack.c.l.s4 1966171168
        %v1089 = vunpack.c.0.s8 %v1088
        %v1090 = vlaneseq
        %v1091 = vshrl.u32 %v1090, 7
        %v1092 = vsub.s32 %v1089, %v1091
        %v1093 = vrot.slane %v1077, %v1092
        %v1095 = vunpack.c.l.s4 1966171168
        %v1096 = vunpack.c.0.s8 %v1095
        %v1097 = vlaneseq
        %v1098 = vshrl.u32 %v1097, 7
        %v1099 = vsub.s32 %v1096, %v1098
        %v1100 = vrot.slane %v1078, %v1099
        %v1102 = vunpack.c.l.s4 1966171168
        %v1103 = vunpack.c.0.s8 %v1102
        %v1104 = vlaneseq
        %v1105 = vshrl.u32 %v1104, 7
        %v1106 = vsub.s32 %v1103, %v1105
        %v1107 = vrot.slane %v1079, %v1106
        %v1108 = vcombine.high %v1086, %v1086
        %v1109 = vcombine.high %v1093, %v1093
        %v1110 = vcombine.high %v1100, %v1100
        %v1111 = vcombine.high %v1107, %v1107
        %v1112 = vlaneseq
        %v1113 = vshrl.u32 %v1112, 7
        %v1114 = vsub.s32 0, %v1113
        %v1115 = vrot.slane %v1086, %v1114
        %v1116 = vlaneseq
        %v1117 = vshrl.u32 %v1116, 7
        %v1118 = vsub.s32 0, %v1117
        %v1119 = vrot.slane %v1100, %v1118
        %v1120 = vlaneseq
        %v1121 = vshrl.u32 %v1120, 7
        %v1122 = vsub.s32 0, %v1121
        %v1123 = vrot.slane %v1108, %v1122
        %v1124 = vlaneseq
        %v1125 = vshrl.u32 %v1124, 7
        %v1126 = vsub.s32 0, %v1125
        %v1127 = vrot.slane %v1110, %v1126
        %v1128 = vlaneseq
        %v1129 = vshrl.u32 %v1128, 7
        %v1130 = vsub.s32 0, %v1129
        %v1131 = vrot.slane %v1093, %v1130
        %v1132 = vlaneseq
        %v1133 = vshrl.u32 %v1132, 7
        %v1134 = vsub.s32 0, %v1133
        %v1135 = vrot.slane %v1107, %v1134
        %v1136 = vlaneseq
        %v1137 = vshrl.u32 %v1136, 7
        %v1138 = vsub.s32 0, %v1137
        %v1139 = vrot.slane %v1109, %v1138
        %v1140 = vlaneseq
        %v1141 = vshrl.u32 %v1140, 7
        %v1142 = vsub.s32 0, %v1141
        %v1143 = vrot.slane %v1111, %v1142
        %v1152 = vmul.f32 %v1115, %v463
        %v1153 = vmul.f32 %v1115, %v464
        %v1154 = vmul.f32 %v1115, %v465
        %v1155 = vmul.f32 %v1115, %v466
        %v1156 = vmul.f32 %v1119, %v467
        %v1157 = vmul.f32 %v1119, %v468
        %v1158 = vmul.f32 %v1119, %v469
        %v1159 = vmul.f32 %v1119, %v470
        %v1160 = vmul.f32 %v1123, %v471
        %v1161 = vmul.f32 %v1123, %v472
        %v1162 = vmul.f32 %v1123, %v473
        %v1163 = vmul.f32 %v1123, %v474
        %v1164 = vmul.f32 %v1127, %v475
        %v1165 = vmul.f32 %v1127, %v476
        %v1166 = vmul.f32 %v1127, %v477
        %v1167 = vmul.f32 %v1127, %v478
        %v1168 = vmul.f32 %v1131, %v479
        %v1169 = vmul.f32 %v1131, %v480
        %v1170 = vmul.f32 %v1131, %v481
        %v1171 = vmul.f32 %v1131, %v482
        %v1172 = vmul.f32 %v1135, %v483
        %v1173 = vmul.f32 %v1135, %v484
        %v1174 = vmul.f32 %v1135, %v485
        %v1175 = vmul.f32 %v1135, %v486
        %v1176 = vmul.f32 %v1139, %v487
        %v1177 = vmul.f32 %v1139, %v488
        %v1178 = vmul.f32 %v1139, %v489
        %v1179 = vmul.f32 %v1139, %v490
        %v1180 = vmul.f32 %v1143, %v491
        %v1181 = vmul.f32 %v1143, %v492
        %v1182 = vmul.f32 %v1143, %v493
        %v1183 = vmul.f32 %v1143, %v494
        %v1184 = vsel %vm625, %v1152, 0.0
        %v1185 = vsel %vm625, %v1156, 0.0
        %v1186 = vadd.f32 %v1184, %v1185
        %v1187 = vsel %vm625, %v1160, 0.0
        %v1188 = vadd.f32 %v1186, %v1187
        %v1189 = vsel %vm625, %v1164, 0.0
        %v1190 = vadd.f32 %v1188, %v1189
        %v1191 = vsel %vm625, %v1168, 0.0
        %v1192 = vadd.f32 %v1190, %v1191
        %v1193 = vsel %vm625, %v1172, 0.0
        %v1194 = vadd.f32 %v1192, %v1193
        %v1195 = vsel %vm625, %v1176, 0.0
        %v1196 = vadd.f32 %v1194, %v1195
        %v1197 = vsel %vm625, %v1180, 0.0
        %v1198 = vadd.f32 %v1196, %v1197
        %v1199 = vsel %vm625, %v1153, 0.0
        %v1200 = vsel %vm625, %v1157, 0.0
        %v1201 = vadd.f32 %v1199, %v1200
        %v1202 = vsel %vm625, %v1161, 0.0
        %v1203 = vadd.f32 %v1201, %v1202
        %v1204 = vsel %vm625, %v1165, 0.0
        %v1205 = vadd.f32 %v1203, %v1204
        %v1206 = vsel %vm625, %v1169, 0.0
        %v1207 = vadd.f32 %v1205, %v1206
        %v1208 = vsel %vm625, %v1173, 0.0
        %v1209 = vadd.f32 %v1207, %v1208
        %v1210 = vsel %vm625, %v1177, 0.0
        %v1211 = vadd.f32 %v1209, %v1210
        %v1212 = vsel %vm625, %v1181, 0.0
        %v1213 = vadd.f32 %v1211, %v1212
        %v1214 = vsel %vm625, %v1154, 0.0
        %v1215 = vsel %vm625, %v1158, 0.0
        %v1216 = vadd.f32 %v1214, %v1215
        %v1217 = vsel %vm625, %v1162, 0.0
        %v1218 = vadd.f32 %v1216, %v1217
        %v1219 = vsel %vm625, %v1166, 0.0
        %v1220 = vadd.f32 %v1218, %v1219
        %v1221 = vsel %vm625, %v1170, 0.0
        %v1222 = vadd.f32 %v1220, %v1221
        %v1223 = vsel %vm625, %v1174, 0.0
        %v1224 = vadd.f32 %v1222, %v1223
        %v1225 = vsel %vm625, %v1178, 0.0
        %v1226 = vadd.f32 %v1224, %v1225
        %v1227 = vsel %vm625, %v1182, 0.0
        %v1228 = vadd.f32 %v1226, %v1227
        %v1229 = vsel %vm625, %v1155, 0.0
        %v1230 = vsel %vm625, %v1159, 0.0
        %v1231 = vadd.f32 %v1229, %v1230
        %v1232 = vsel %vm625, %v1163, 0.0
        %v1233 = vadd.f32 %v1231, %v1232
        %v1234 = vsel %vm625, %v1167, 0.0
        %v1235 = vadd.f32 %v1233, %v1234
        %v1236 = vsel %vm625, %v1171, 0.0
        %v1237 = vadd.f32 %v1235, %v1236
        %v1238 = vsel %vm625, %v1175, 0.0
        %v1239 = vadd.f32 %v1237, %v1238
        %v1240 = vsel %vm625, %v1179, 0.0
        %v1241 = vadd.f32 %v1239, %v1240
        %v1242 = vsel %vm625, %v1183, 0.0
        %v1243 = vadd.f32 %v1241, %v1242
        %v1244 = vadd.f32 %v1058, %v1198
        %v1245 = vadd.f32 %v1059, %v1213
        %v1246 = vadd.f32 %v1060, %v1228
        %v1247 = vadd.f32 %v1061, %v1243
        %v1249 = vsel %vm625, %v1244, 0
        %v1252 = vsel %vm625, %v1245, 0
        %v1255 = vsel %vm625, %v1246, 0
        %v1258 = vsel %vm625, %v1247, 0
        %1260 = vmatprep.subr.mxu0 0.0
        %1261 = vmatpush1.msra.mxu0 %v495
        %1262 = vmatprep.subr.mxu0 0.0
        %1263 = vmatpush1.msra.mxu0 %v496
        %1264 = vmatprep.subr.mxu0 0.0
        %1265 = vmatpush1.msra.mxu0 %v497
        %1266 = vmatprep.subr.mxu0 0.0
        %1267 = vmatpush1.msra.mxu0 %v498
        %1268 = vmatprep.subr.mxu0 0.0
        %1269 = vmatpush1.msra.mxu0 %v499
        %1270 = vmatprep.subr.mxu0 0.0
        %1271 = vmatpush1.msra.mxu0 %v500
        %1272 = vmatprep.subr.mxu0 0.0
        %1273 = vmatpush1.msra.mxu0 %v501
        %1274 = vmatprep.subr.mxu0 0.0
        %1275 = vmatpush1.msra.mxu0 %v502
        %1276 = vmatprep.subr.mxu0 0.0
        %1277 = vmatpush1.msra.mxu0 0.0
        %1278 = vmatprep.subr.mxu0 0.0
        %1279 = vmatpush1.msra.mxu0 0.0
        %1280 = vmatprep.subr.mxu0 0.0
        %1281 = vmatpush1.msra.mxu0 0.0
        %1282 = vmatprep.subr.mxu0 0.0
        %1283 = vmatpush1.msra.mxu0 0.0
        %1284 = vmatprep.subr.mxu0 0.0
        %1285 = vmatpush1.msra.mxu0 0.0
        %1286 = vmatprep.subr.mxu0 0.0
        %1287 = vmatpush1.msra.mxu0 0.0
        %1288 = vmatprep.subr.mxu0 0.0
        %1289 = vmatpush1.msra.mxu0 0.0
        %1290 = vmatprep.subr.mxu0 0.0
        %1291 = vmatpush1.msra.mxu0 0.0
        %1292 = vmatprep.subr.mxu0 0.0
        %1293 = vmatpush1.msra.mxu0 0.0
        %1294 = vmatprep.subr.mxu0 0.0
        %1295 = vmatpush1.msra.mxu0 0.0
        %1296 = vmatprep.subr.mxu0 0.0
        %1297 = vmatpush1.msra.mxu0 0.0
        %1298 = vmatprep.subr.mxu0 0.0
        %1299 = vmatpush1.msra.mxu0 0.0
        %1300 = vmatprep.subr.mxu0 0.0
        %1301 = vmatpush1.msra.mxu0 0.0
        %1302 = vmatprep.subr.mxu0 0.0
        %1303 = vmatpush1.msra.mxu0 0.0
        %1304 = vmatprep.subr.mxu0 0.0
        %1305 = vmatpush1.msra.mxu0 0.0
        %1306 = vmatprep.subr.mxu0 0.0
        %1307 = vmatpush1.msra.mxu0 0.0
        %1308 = vmatprep.subr.mxu0 0.0
        %1309 = vmatpush1.msra.mxu0 0.0
        %1310 = vmatprep.subr.mxu0 0.0
        %1311 = vmatpush1.msra.mxu0 0.0
        %1312 = vmatprep.subr.mxu0 0.0
        %1313 = vmatpush1.msra.mxu0 0.0
        %1314 = vmatprep.subr.mxu0 0.0
        %1315 = vmatpush1.msra.mxu0 0.0
        %1316 = vmatprep.subr.mxu0 0.0
        %1317 = vmatpush1.msra.mxu0 0.0
        %1318 = vmatprep.subr.mxu0 0.0
        %1319 = vmatpush1.msra.mxu0 0.0
        %1320 = vmatprep.subr.mxu0 0.0
        %1321 = vmatpush1.msra.mxu0 0.0
        %1322 = vmatprep.subr.mxu0 0.0
        %1323 = vmatpush1.msra.mxu0 0.0
        %1324 = vmatprep.mubr.f32.mxu0 0.0
        %1325 = vmatmul.mubr.f32.gmra.mrb[0].mxu0 %v1249
        %v1326 = vpop.f32.mrb[0].mxu0
        %v1327 = vadd.f32 0.0, %v1326
        %v1328 = vpop.f32.mrb[0].mxu0
        %1329 = vmatprep.mubr.f32.mxu0 0.0
        %1330 = vmatmul.mubr.f32.gmra.mrb[0].mxu0 %v1252
        %v1331 = vpop.f32.mrb[0].mxu0
        %v1332 = vadd.f32 0.0, %v1331
        %v1333 = vpop.f32.mrb[0].mxu0
        %1334 = vmatprep.mubr.f32.mxu0 0.0
        %1335 = vmatmul.mubr.f32.gmra.mrb[0].mxu0 %v1255
        %v1336 = vpop.f32.mrb[0].mxu0
        %v1337 = vadd.f32 0.0, %v1336
        %v1338 = vpop.f32.mrb[0].mxu0
        %1339 = vmatprep.mubr.f32.mxu0 0.0
        %1340 = vmatmul.mubr.f32.gmra.mrb[0].mxu0 %v1258
        %v1341 = vpop.f32.mrb[0].mxu0
        %v1342 = vadd.f32 0.0, %v1341
        %v1343 = vpop.f32.mrb[0].mxu0
        %1344 = vdwg.mxu0
        %1345 = vst [vmem:[%s259] sm:$0xff] %v1327
        %1346 = vst [vmem:[%s259 + $0x8] sm:$0xff] %v1332
        %1347 = vst [vmem:[%s259 + $0x10] sm:$0xff] %v1337
        %1348 = vst [vmem:[%s259 + $0x18] sm:$0xff] %v1342
        %s1349 = sand.u32 %s120, 1
        %s1350 = scalar_lea.sflag [#allocation4], %s1349
        %s1351 = sand.u32 %s120, 1
        %s1352 = smul.addr %s1351, 32
        %s1353 = scalar_lea.vmem [#allocation10], %s1352
        // Predicated region
        $region53: #{spectral_conv1d.1} parent=35 // pred_check
          %p1354 = pneg %p130
        $region54: #{spectral_conv1d.1} parent=35 // pred_check_branch
          %1356 = sbr.rel (%p1354) target = $region56
        $region55: #{spectral_conv1d.1} parent=35 // pred_region
          %s1357 = smul.u32 4, %s23
          %s1359 = ssub.s32 512, 512
          %1360 = vsyncadd %s1350, %s1359
          %s1361 = smul.addr %s1357, 128
          %s1362 = scalar_lea.hbm %s4, %s1361
          %s1363 = sshll.u32 %s1353, 4
          %s1364 = int_to_ptr.vmem [resolvable:$true] %s1363
          %1369 = dma.vmem_to_hbm [thread:$0]  %s1364, 512, %s1362, %s1350, 128, 128, 8
        $region56: #{spectral_conv1d.1} parent=35 // pred_fallthru
          _
      $region36: #{spectral_conv1d.1} parent=5 // pred_fallthru
        _
      %p1370 = scmp.le.s32.totalorder 2, %s18
      // Predicated region
      $region57: #{spectral_conv1d.1} parent=5 // pred_check
        %p1371 = pneg %p1370
      $region58: #{spectral_conv1d.1} parent=5 // pred_check_branch
        %1373 = sbr.rel (%p1371) target = $region60
      $region59: #{spectral_conv1d.1} parent=5 // pred_region
        %s1374 = ssub.s32 %s18, 2
        // Predicated region
        $region61: #{spectral_conv1d.1} parent=59 // pred_check
          %p1375 = pneg %p136
        $region62: #{spectral_conv1d.1} parent=59 // pred_check_branch
          %1377 = sbr.rel (%p1375) target = $region64
        $region63: #{spectral_conv1d.1} parent=59 // pred_region
          %s1378 = sand.u32 %s121, 1
          %s1379 = scalar_lea.sflag [#allocation4], %s1378
          %s1380 = sand.u32 %s121, 1
          %s1381 = smul.addr %s1380, 32
          %s1382 = scalar_lea.vmem [#allocation10], %s1381
          %1383 = dma.done %s1379, 512
        $region64: #{spectral_conv1d.1} parent=59 // pred_fallthru
          _
      $region60: #{spectral_conv1d.1} parent=5 // pred_fallthru
        _
    $region6: #{spectral_conv1d.1} parent=1 // loop_footer
      %s22 = sadd.s32 1, %s18
    $region7: #{spectral_conv1d.1} parent=1 // loop_footer_branch
      %17 = sbr.rel target = $region3
    $region8: #{spectral_conv1d.1} parent=1 // loop_exit
      _
    %1384 = vsyncpa [#allocation3], 1
    %s1385 = scalar_lea.sflag [#allocation3], 1
    %1386 = vsyncpa %s1385, 1
    %1387 = vsyncpa [#allocation6], 1
    %1388 = vsyncpa [#allocation9], 1
    %1389 = vsyncpa [#allocation4], 1
    %s1390 = scalar_lea.sflag [#allocation4], 1
    %1391 = vsyncpa %s1390, 1

</llo_original>
